<compile_context>
chip_gen: v5e
topology: v5e:2x2
jax: 0.10.0
libtpu: 0.0.40
codegen_flags: <defaults>
</compile_context>

<pallas_src>
import functools

import jax
import jax.numpy as jnp
from jax.experimental import pallas as pl
from jax.experimental.pallas import tpu as pltpu

_LANE = 128
_SUBLANE = 8
_VMEM_LIMIT_BYTES = 32 * 1024 * 1024  # covers v5e's 16 MiB scoped default; safe on v6e/v7x


def _round_up(n, m):
    return ((n + m - 1) // m) * m


def _bf16_elementwise_ok():
    """v6e/v7x VALUs have native bf16; v5e (and older) do not -> keep ReLU in f32 there."""
    try:
        kind = jax.devices()[0].device_kind.lower()
    except Exception:
        return False
    return not any(tag in kind for tag in ("v2", "v3", "v4", "v5"))


def _make_kernel(bf16_elementwise):
    def kernel(x_ref, w1_ref, b1_ref, w2_ref, b2_ref, w3_ref, b3_ref, o_ref):
        """Fused forward for one batch tile.

        Matmul operands are bf16 (MXU rate), accumulation is f32.  ReLU runs in
        bf16 on chips with a bf16 VPU (v6e/v7x) and in f32 on v5e.  Only the one
        real logit column is kept: bias-add + sigmoid act on the (tile, 1) column
        and the store is (tile, 1) f32, so output DMA / EUP work is not inflated
        128x by lane padding.
        """
        def relu_to_bf16(h):
            if bf16_elementwise:
                return jnp.maximum(h.astype(jnp.bfloat16), 0.0)   # bf16 VPU path
            return jnp.maximum(h, 0.0).astype(jnp.bfloat16)       # f32 VPU path (v5e)

        x = x_ref[...]                                                        # bf16 (T, S_pad)
        h = jnp.dot(x, w1_ref[...], preferred_element_type=jnp.float32) + b1_ref[...]
        h = relu_to_bf16(h)
        h = jnp.dot(h, w2_ref[...], preferred_element_type=jnp.float32) + b2_ref[...]
        h = relu_to_bf16(h)
        logits = jnp.dot(h, w3_ref[...], preferred_element_type=jnp.float32)  # (T, 128) f32
        logit = logits[:, :1] + b3_ref[...]                                   # (T, 1) f32
        o_ref[...] = jax.nn.sigmoid(logit).astype(o_ref.dtype)

    return kernel


def prepare_params(params):
    """Pad feature dims once (lane-dense) and cast weights to bf16.

    w1: (state_dim, hidden) -> (s_pad, h_pad) bf16
    w2: (hidden, hidden)    -> (h_pad, h_pad) bf16
    w3: (hidden, 1)         -> (h_pad, 128)   bf16 (MXU-friendly last matmul;
                                               the kernel keeps only column 0)
    b3: (1, 1) f32 (added to the sliced column).
    Zero-padded hidden columns stay exactly zero through ReLU and contribute
    nothing downstream, so the math matches the unpadded model.
    """
    state_dim, hidden_dim = params["w1"].shape
    s_pad = _round_up(state_dim, _LANE)
    h_pad = _round_up(hidden_dim, _LANE)

    def pad2(a, rows, cols):
        return jnp.pad(a, ((0, rows - a.shape[0]), (0, cols - a.shape[1])))

    return {
        "w1": pad2(params["w1"], s_pad, h_pad).astype(jnp.bfloat16),
        "b1": pad2(params["b1"], 1, h_pad).astype(jnp.float32),
        "w2": pad2(params["w2"], h_pad, h_pad).astype(jnp.bfloat16),
        "b2": pad2(params["b2"], 1, h_pad).astype(jnp.float32),
        "w3": pad2(params["w3"], h_pad, _LANE).astype(jnp.bfloat16),
        "b3": params["b3"].astype(jnp.float32).reshape(1, 1),
    }


def _pick_batch_tile(B, target=1024):
    """Largest multiple of 8 that is <= target and leaves the grid with >=2 steps
    whenever B > 8 (keeps both v7x TensorCores busy and gives the pipeline
    something to overlap).  The batch is padded up to a multiple of the tile,
    so no divisibility of B is required."""
    b8 = _round_up(max(int(B), 1), _SUBLANE)
    if b8 <= _SUBLANE:
        return _SUBLANE
    half = _round_up(pl.cdiv(b8, 2), _SUBLANE)   # cap so there are at least 2 grid steps
    tile = min(target, half)
    return max(_SUBLANE, (tile // _SUBLANE) * _SUBLANE)


def safe_critic_forward(x, prepped, *, batch_tile=None):
    """x: (B, state_dim) f32, or a pre-padded (B, s_pad) bf16 batch.  Returns (B, 1) f32.

    NOTE: call this under jax.jit (as in __main__) so the input pad/cast fuses
    with the producer of x instead of making a standalone HBM pass; for repeated
    calls on a fixed batch, keep x pre-padded/pre-cast to bf16 across calls.
    """
    B = x.shape[0]
    s_pad, h_pad = prepped["w1"].shape
    o_mxu = prepped["w3"].shape[1]

    if batch_tile is None:
        batch_tile = _pick_batch_tile(B)
    assert batch_tile % _SUBLANE == 0, (
        f"batch_tile={batch_tile} must be a multiple of {_SUBLANE}")

    b_pad = _round_up(B, batch_tile)
    grid = (b_pad // batch_tile,)

    if x.shape[1] == s_pad and x.dtype == jnp.bfloat16:
        x_p = jnp.pad(x, ((0, b_pad - B), (0, 0)))           # already padded/cast by caller
    else:
        assert x.shape[1] <= s_pad, "x has more features than the prepared weights"
        x_p = jnp.pad(x, ((0, b_pad - B), (0, s_pad - x.shape[1]))).astype(jnp.bfloat16)

    flops = 2 * b_pad * (s_pad * h_pad + h_pad * h_pad + h_pad * o_mxu)
    bytes_accessed = (
        int(x_p.size) * x_p.dtype.itemsize
        + b_pad * 1 * 4
        + sum(int(v.size) * v.dtype.itemsize for v in prepped.values()))
    cost = pl.CostEstimate(flops=flops, transcendentals=b_pad,
                           bytes_accessed=bytes_accessed)

    # Weights/biases use a constant index_map, so the pipeline only DMAs them
    # once; at well under 1 MiB total, their default double buffer is negligible,
    # so no version-dependent pipeline_mode tweaking (and no silent fallback).
    def const_spec(shape):
        return pl.BlockSpec(shape, lambda i: (0, 0))

    in_specs = [
        pl.BlockSpec((batch_tile, s_pad), lambda i: (i, 0)),
        const_spec(prepped["w1"].shape), const_spec(prepped["b1"].shape),
        const_spec(prepped["w2"].shape), const_spec(prepped["b2"].shape),
        const_spec(prepped["w3"].shape), const_spec(prepped["b3"].shape),
    ]
    # Narrow real output: last block dim (1) equals the full array dim, so the
    # (8, 128) rule is satisfied and we avoid a 128x-redundant f32 writeback.
    out_specs = pl.BlockSpec((batch_tile, 1), lambda i: (i, 0))

    out = pl.pallas_call(
        _make_kernel(_bf16_elementwise_ok()),
        out_shape=jax.ShapeDtypeStruct((b_pad, 1), jnp.float32),
        grid_spec=pltpu.PrefetchScalarGridSpec(
            num_scalar_prefetch=0,
            grid=grid,
            in_specs=in_specs,
            out_specs=out_specs,
        ),
        compiler_params=pltpu.CompilerParams(
            dimension_semantics=("parallel",),
            vmem_limit_bytes=_VMEM_LIMIT_BYTES),
        cost_estimate=cost,
    )(x_p,
      prepped["w1"], prepped["b1"],
      prepped["w2"], prepped["b2"],
      prepped["w3"], prepped["b3"])

    return out[:B]


def init_safe_critic_params(key, state_dim, hidden_dim=300):
    """Deterministic init matching nn.Linear default (U(-1/sqrt(fan_in), +))."""
    layer_dims = [(state_dim, hidden_dim), (hidden_dim, hidden_dim), (hidden_dim, 1)]
    params = {}
    for idx, (fan_in, fan_out) in enumerate(layer_dims, start=1):
        key, kw, kb = jax.random.split(key, 3)
        bound = 1.0 / (float(fan_in) ** 0.5)
        params[f"w{idx}"] = jax.random.uniform(
            kw, (fan_in, fan_out), jnp.float32, -bound, bound)
        params[f"b{idx}"] = jax.random.uniform(
            kb, (1, fan_out), jnp.float32, -bound, bound)
    return params


def safe_critic_reference(x, params):
    """Plain-JAX f32 reference for correctness checking."""
    h = jnp.maximum(x @ params["w1"] + params["b1"], 0.0)
    h = jnp.maximum(h @ params["w2"] + params["b2"], 0.0)
    return jax.nn.sigmoid(h @ params["w3"] + params["b3"])


if __name__ == "__main__":
    # Small shapes consistent with SafeCritic(state_dim, hidden_dim=300).
    B, state_dim, hidden_dim = 16, 10, 300

    key = jax.random.PRNGKey(0)
    key, kx = jax.random.split(key)
    x = jax.random.normal(kx, (B, state_dim), jnp.float32)
    params = init_safe_critic_params(key, state_dim, hidden_dim)

    prepped = prepare_params(params)

    # jit so the input pad/cast fuses with the kernel's launch; at B=16 the tile
    # picker chooses 8 -> grid=(2,), exercising the pipelined multi-step path.
    fwd = jax.jit(safe_critic_forward)
    out = jax.block_until_ready(fwd(x, prepped))

    ref = safe_critic_reference(x, params)
    assert out.shape == (B, 1)
    assert bool(jnp.all(jnp.isfinite(out)))
    # bf16 matmul operands with f32 accumulation -> loosened tolerance vs f32 ref.
    assert jnp.allclose(out, ref, atol=2e-2, rtol=2e-2), "mismatch vs reference"

    print("KERNEL_OK")
</pallas_src>

<mosaic_0001>
module attributes {stable_mosaic.version = 11 : i64} {
  func.func @kernel(%arg0: i32, %arg1: memref<8x128xbf16, #tpu.memory_space<vmem>>, %arg2: memref<128x384xbf16, #tpu.memory_space<vmem>>, %arg3: memref<1x384xf32, #tpu.memory_space<vmem>>, %arg4: memref<384x384xbf16, #tpu.memory_space<vmem>>, %arg5: memref<1x384xf32, #tpu.memory_space<vmem>>, %arg6: memref<384x128xbf16, #tpu.memory_space<vmem>>, %arg7: memref<1x1xf32, #tpu.memory_space<vmem>>, %arg8: memref<8x1xf32, #tpu.memory_space<vmem>>) attributes {dimension_semantics = [#tpu.dimension_semantics<parallel>], iteration_bounds = array<i64: 2>, scalar_prefetch = 0 : i64, scratch_operands = 0 : i64, tpu.core_type = #tpu.core_type<tc>, window_params = [{transform_indices = @transform_0, window_bounds = array<i64: 8, 128>}, {pipeline_mode = #tpu.pipeline_mode<synchronous>, transform_indices = @transform_1, window_bounds = array<i64: 128, 384>}, {pipeline_mode = #tpu.pipeline_mode<synchronous>, transform_indices = @transform_2, window_bounds = array<i64: 1, 384>}, {pipeline_mode = #tpu.pipeline_mode<synchronous>, transform_indices = @transform_3, window_bounds = array<i64: 384, 384>}, {pipeline_mode = #tpu.pipeline_mode<synchronous>, transform_indices = @transform_4, window_bounds = array<i64: 1, 384>}, {pipeline_mode = #tpu.pipeline_mode<synchronous>, transform_indices = @transform_5, window_bounds = array<i64: 384, 128>}, {pipeline_mode = #tpu.pipeline_mode<synchronous>, transform_indices = @transform_6, window_bounds = array<i64: 1, 1>}, {transform_indices = @transform_7, window_bounds = array<i64: 8, 1>}]} {
    %c0 = arith.constant 0 : index
    %c0_0 = arith.constant 0 : index
    %0 = vector.load %arg1[%c0, %c0_0] : memref<8x128xbf16, #tpu.memory_space<vmem>>, vector<8x128xbf16>
    %c0_1 = arith.constant 0 : index
    %c0_2 = arith.constant 0 : index
    %1 = vector.load %arg2[%c0_1, %c0_2] : memref<128x384xbf16, #tpu.memory_space<vmem>>, vector<128x384xbf16>
    %cst = arith.constant dense<0.000000e+00> : vector<8x384xf32>
    %2 = tpu.matmul %0, %1, %cst {dimension_numbers = #tpu.dot_dimension_numbers<[1], [0], [0], [1], [0, 0, 1, 1], [], []>} : vector<8x128xbf16>, vector<128x384xbf16>, vector<8x384xf32> -> vector<8x384xf32>
    %c0_3 = arith.constant 0 : index
    %c0_4 = arith.constant 0 : index
    %3 = vector.load %arg3[%c0_3, %c0_4] : memref<1x384xf32, #tpu.memory_space<vmem>>, vector<1x384xf32>
    %4 = vector.broadcast %3 : vector<1x384xf32> to vector<8x384xf32>
    %5 = arith.addf %2, %4 : vector<8x384xf32>
    %6 = arith.truncf %5 : vector<8x384xf32> to vector<8x384xbf16>
    %cst_5 = arith.constant 0.000000e+00 : bf16
    %7 = vector.broadcast %cst_5 : bf16 to vector<8x384xbf16>
    %8 = arith.maximumf %6, %7 : vector<8x384xbf16>
    %c0_6 = arith.constant 0 : index
    %c0_7 = arith.constant 0 : index
    %9 = vector.load %arg4[%c0_6, %c0_7] : memref<384x384xbf16, #tpu.memory_space<vmem>>, vector<384x384xbf16>
    %cst_8 = arith.constant dense<0.000000e+00> : vector<8x384xf32>
    %10 = tpu.matmul %8, %9, %cst_8 {dimension_numbers = #tpu.dot_dimension_numbers<[1], [0], [0], [1], [0, 0, 1, 1], [], []>} : vector<8x384xbf16>, vector<384x384xbf16>, vector<8x384xf32> -> vector<8x384xf32>
    %c0_9 = arith.constant 0 : index
    %c0_10 = arith.constant 0 : index
    %11 = vector.load %arg5[%c0_9, %c0_10] : memref<1x384xf32, #tpu.memory_space<vmem>>, vector<1x384xf32>
    %12 = vector.broadcast %11 : vector<1x384xf32> to vector<8x384xf32>
    %13 = arith.addf %10, %12 : vector<8x384xf32>
    %14 = arith.truncf %13 : vector<8x384xf32> to vector<8x384xbf16>
    %cst_11 = arith.constant 0.000000e+00 : bf16
    %15 = vector.broadcast %cst_11 : bf16 to vector<8x384xbf16>
    %16 = arith.maximumf %14, %15 : vector<8x384xbf16>
    %c0_12 = arith.constant 0 : index
    %c0_13 = arith.constant 0 : index
    %17 = vector.load %arg6[%c0_12, %c0_13] : memref<384x128xbf16, #tpu.memory_space<vmem>>, vector<384x128xbf16>
    %cst_14 = arith.constant dense<0.000000e+00> : vector<8x128xf32>
    %18 = tpu.matmul %16, %17, %cst_14 {dimension_numbers = #tpu.dot_dimension_numbers<[1], [0], [0], [1], [0, 0, 1, 1], [], []>} : vector<8x384xbf16>, vector<384x128xbf16>, vector<8x128xf32> -> vector<8x128xf32>
    %19 = vector.extract_strided_slice %18 {offsets = [0, 0], sizes = [8, 1], strides = [1, 1]} : vector<8x128xf32> to vector<8x1xf32>
    %c0_15 = arith.constant 0 : index
    %c0_16 = arith.constant 0 : index
    %20 = vector.load %arg7[%c0_15, %c0_16] : memref<1x1xf32, #tpu.memory_space<vmem>>, vector<1x1xf32>
    %21 = vector.broadcast %20 : vector<1x1xf32> to vector<8x1xf32>
    %22 = arith.addf %19, %21 : vector<8x1xf32>
    %23 = arith.negf %22 : vector<8x1xf32>
    %24 = math.exp %23 : vector<8x1xf32>
    %cst_17 = arith.constant 1.000000e+00 : f32
    %25 = vector.broadcast %cst_17 : f32 to vector<8x1xf32>
    %26 = arith.addf %25, %24 : vector<8x1xf32>
    %27 = arith.divf %25, %26 : vector<8x1xf32>
    %c0_18 = arith.constant 0 : index
    %c0_19 = arith.constant 0 : index
    %28 = vector.load %arg8[%c0_18, %c0_19] : memref<8x1xf32, #tpu.memory_space<vmem>>, vector<8x1xf32>
    tpu.vector_store %arg8[%c0_18, %c0_19], %27 {strides = array<i32>} : memref<8x1xf32, #tpu.memory_space<vmem>>, vector<8x1xf32>,
    return
  }
  func.func @transform_0(%arg0: i32) -> (i32, i32) {
    %c0_i32 = arith.constant 0 : i32
    %c0_i32_0 = arith.constant 0 : i32
    return %arg0, %c0_i32 : i32, i32
  }
  func.func @transform_1(%arg0: i32) -> (i32, i32) {
    %c0_i32 = arith.constant 0 : i32
    %c0_i32_0 = arith.constant 0 : i32
    %c0_i32_1 = arith.constant 0 : i32
    return %c0_i32, %c0_i32_0 : i32, i32
  }
  func.func @transform_2(%arg0: i32) -> (i32, i32) {
    %c0_i32 = arith.constant 0 : i32
    %c0_i32_0 = arith.constant 0 : i32
    %c0_i32_1 = arith.constant 0 : i32
    return %c0_i32, %c0_i32_0 : i32, i32
  }
  func.func @transform_3(%arg0: i32) -> (i32, i32) {
    %c0_i32 = arith.constant 0 : i32
    %c0_i32_0 = arith.constant 0 : i32
    %c0_i32_1 = arith.constant 0 : i32
    return %c0_i32, %c0_i32_0 : i32, i32
  }
  func.func @transform_4(%arg0: i32) -> (i32, i32) {
    %c0_i32 = arith.constant 0 : i32
    %c0_i32_0 = arith.constant 0 : i32
    %c0_i32_1 = arith.constant 0 : i32
    return %c0_i32, %c0_i32_0 : i32, i32
  }
  func.func @transform_5(%arg0: i32) -> (i32, i32) {
    %c0_i32 = arith.constant 0 : i32
    %c0_i32_0 = arith.constant 0 : i32
    %c0_i32_1 = arith.constant 0 : i32
    return %c0_i32, %c0_i32_0 : i32, i32
  }
  func.func @transform_6(%arg0: i32) -> (i32, i32) {
    %c0_i32 = arith.constant 0 : i32
    %c0_i32_0 = arith.constant 0 : i32
    %c0_i32_1 = arith.constant 0 : i32
    return %c0_i32, %c0_i32_0 : i32, i32
  }
  func.func @transform_7(%arg0: i32) -> (i32, i32) {
    %c0_i32 = arith.constant 0 : i32
    %c0_i32_0 = arith.constant 0 : i32
    return %arg0, %c0_i32 : i32, i32
  }
}

</mosaic_0001>

<llo_original>
// kernel: safe_critic_forward.1
$region0: #{safe_critic_forward.1}
  #allocation0 [shape = 'u32[]', space=smem, size = 0x4, offset = 0x4, fixed_abs, tag = 'smem constant byte address 0x4 - core index']
  #allocation1 [shape = 'u32[72,128]{1,0:T(1,128)}', space=vmem, size = 0x9000, scoped, tag = 'internal scratch']
  #allocation2 [shape = 'f32[1,1]{1,0:T(1,128)S(1)}', space=vmem, size = 0x200, scoped, tag = 'scoped memory for safe_critic_forward.1']
  %s0 = inlined_call_operand.vmem [shape: bf16[16,128], index: 0, kind: input, shape index: {}]
  %s1 = inlined_call_operand.hbm [shape: bf16[128,384], index: 1, kind: input, shape index: {}]
  %s2 = inlined_call_operand.vmem [shape: f32[1,384], index: 2, kind: input, shape index: {}]
  %s3 = inlined_call_operand.hbm [shape: bf16[384,384], index: 3, kind: input, shape index: {}]
  %s4 = inlined_call_operand.vmem [shape: f32[1,384], index: 4, kind: input, shape index: {}]
  %s5 = inlined_call_operand.hbm [shape: bf16[384,128], index: 5, kind: input, shape index: {}]
  %s6 = inlined_call_operand.<no memory space> [shape: f32[1,1], index: 6, kind: input, shape index: {}]
  %s7 = inlined_call_operand.vmem [shape: f32[16,1], index: 7, kind: output, shape index: {}]
  %s8 = sld [smem:[#allocation0]]
  $region73: #{safe_critic_forward.1} parent=0
    _
  %s10 = ssub.s32 1, %s8
  %s11 = scalar_select 0, %s10, %s8
  %v12 = vstv %s6
  %13 = vst [vmem:[#allocation2] sm:$0x1] %v12
  $region1: #{safe_critic_forward.1} parent=0
    #allocation3 [shape = 'u8[98304]{0}', space=vmem, size = 0x18000, scoped, tag = 'input window, operand 1, single buffered']
    #allocation4 [shape = 's32[2]{0}', space=sflag, size = 0x8, scoped, tag = 'scoped memory for safe_critic_forward.1']
    #allocation5 [shape = 'u8[294912]{0}', space=vmem, size = 0x48000, scoped, tag = 'input window, operand 3, single buffered']
    #allocation6 [shape = 's32[1]{0}', space=sflag, size = 0x4, scoped, tag = 'scoped memory for safe_critic_forward.1']
    #allocation7 [shape = 'u8[98304]{0}', space=vmem, size = 0x18000, scoped, tag = 'input window, operand 5, single buffered']
    %14 = vsyncpa [#allocation4], 0
    %15 = vsyncpa [#allocation6], 0
    loop: start=0, step=1, limit=4
    $region2: #{safe_critic_forward.1} parent=1 // loop_pre_header
      _
    $region3: #{safe_critic_forward.1} parent=1 // loop_header
      %s17 = sphi 0, %s21
      %p18 = scmp.ge.s32.totalorder %s17, 4
      %s27 = sphi 0, %s29
      %s30 = sphi 0, %s27
      %s31 = sphi 0, %s30
      %s47 = sphi 0, %s31
      %s51 = sphi 0, %s51
      %s53 = sphi 0, %s51
      %s54 = sphi 0, %s53
      %s68 = sphi 0, %s54
      %s72 = sphi 0, %s72
      %s74 = sphi 0, %s72
      %s75 = sphi 0, %s74
      %s89 = sphi 0, %s75
      %s93 = sphi 0, %s93
      %s95 = sphi 0, %s93
      %s96 = sphi 0, %s95
      %s110 = sphi 0, %s96
      %s114 = sphi 0, %s114
      %s116 = sphi 0, %s114
      %s117 = sphi 0, %s116
      %s131 = sphi 0, %s117
      %s135 = sphi 0, %s135
      %s137 = sphi 0, %s135
      %s138 = sphi 0, %s137
      %s152 = sphi 0, %s138
      %s156 = sphi 0, %s156
      %s158 = sphi 0, %s156
      %s159 = sphi 0, %s158
      %s173 = sphi 0, %s159
      %s179 = sphi 0, %s181
      %s182 = sphi 0, %s179
      %s183 = sphi 0, %s182
      %s199 = sphi 0, %s183
    $region4: #{safe_critic_forward.1} parent=1 // loop_header_branch
      %20 = sbr.rel (%p18) target = $region8
    $region5: #{safe_critic_forward.1} parent=1 // loop_body
      %s22 = ssub.s32 %s17, 1
      %s23 = ssub.s32 %s17, 2
      %s24 = sadd.s32 %s17, 1
      %s25 = ssub.s32 %s17, %s24
      %p26 = scmp.eq.s32.totalorder %s25, 0
      %s28 = sadd.s32 %s27, 1
      %s29 = scalar_select %p26, %s27, %s28
      %p32 = pneg %p26
      %p33 = scmp.eq.s32.totalorder %s17, 1
      %p34 = por %p32, %p33
      %p35 = scmp.ne.s32.totalorder %s27, %s30
      %p36 = scmp.eq.s32.totalorder %s17, 0
      %p37 = por %p35, %p36
      %p38 = scmp.ne.s32.totalorder %s27, %s30
      %p39 = scmp.eq.s32.totalorder %s22, 1
      %p40 = por %p38, %p39
      %p41 = scmp.ne.s32.totalorder %s30, %s31
      %p42 = scmp.eq.s32.totalorder %s22, 0
      %p43 = por %p41, %p42
      %p44 = scmp.ne.s32.totalorder %s30, %s31
      %p45 = scmp.eq.s32.totalorder %s23, 1
      %p46 = por %p44, %p45
      %p48 = scmp.ne.s32.totalorder %s31, %s47
      %p49 = scmp.eq.s32.totalorder %s23, 0
      %p50 = por %p48, %p49
      %s52 = sadd.s32 %s51, 1
      %p55 = scmp.eq.s32.totalorder %s17, 1
      %p56 = scmp.ne.s32.totalorder %s51, %s53
      %p57 = scmp.eq.s32.totalorder %s17, 0
      %p58 = por %p56, %p57
      %p59 = scmp.ne.s32.totalorder %s51, %s53
      %p60 = scmp.eq.s32.totalorder %s22, 1
      %p61 = por %p59, %p60
      %p62 = scmp.ne.s32.totalorder %s53, %s54
      %p63 = scmp.eq.s32.totalorder %s22, 0
      %p64 = por %p62, %p63
      %p65 = scmp.ne.s32.totalorder %s53, %s54
      %p66 = scmp.eq.s32.totalorder %s23, 1
      %p67 = por %p65, %p66
      %p69 = scmp.ne.s32.totalorder %s54, %s68
      %p70 = scmp.eq.s32.totalorder %s23, 0
      %p71 = por %p69, %p70
      %s73 = sadd.s32 %s72, 1
      %p76 = scmp.eq.s32.totalorder %s17, 1
      %p77 = scmp.ne.s32.totalorder %s72, %s74
      %p78 = scmp.eq.s32.totalorder %s17, 0
      %p79 = por %p77, %p78
      %p80 = scmp.ne.s32.totalorder %s72, %s74
      %p81 = scmp.eq.s32.totalorder %s22, 1
      %p82 = por %p80, %p81
      %p83 = scmp.ne.s32.totalorder %s74, %s75
      %p84 = scmp.eq.s32.totalorder %s22, 0
      %p85 = por %p83, %p84
      %p86 = scmp.ne.s32.totalorder %s74, %s75
      %p87 = scmp.eq.s32.totalorder %s23, 1
      %p88 = por %p86, %p87
      %p90 = scmp.ne.s32.totalorder %s75, %s89
      %p91 = scmp.eq.s32.totalorder %s23, 0
      %p92 = por %p90, %p91
      %s94 = sadd.s32 %s93, 1
      %p97 = scmp.eq.s32.totalorder %s17, 1
      %p98 = scmp.ne.s32.totalorder %s93, %s95
      %p99 = scmp.eq.s32.totalorder %s17, 0
      %p100 = por %p98, %p99
      %p101 = scmp.ne.s32.totalorder %s93, %s95
      %p102 = scmp.eq.s32.totalorder %s22, 1
      %p103 = por %p101, %p102
      %p104 = scmp.ne.s32.totalorder %s95, %s96
      %p105 = scmp.eq.s32.totalorder %s22, 0
      %p106 = por %p104, %p105
      %p107 = scmp.ne.s32.totalorder %s95, %s96
      %p108 = scmp.eq.s32.totalorder %s23, 1
      %p109 = por %p107, %p108
      %p111 = scmp.ne.s32.totalorder %s96, %s110
      %p112 = scmp.eq.s32.totalorder %s23, 0
      %p113 = por %p111, %p112
      %s115 = sadd.s32 %s114, 1
      %p118 = scmp.eq.s32.totalorder %s17, 1
      %p119 = scmp.ne.s32.totalorder %s114, %s116
      %p120 = scmp.eq.s32.totalorder %s17, 0
      %p121 = por %p119, %p120
      %p122 = scmp.ne.s32.totalorder %s114, %s116
      %p123 = scmp.eq.s32.totalorder %s22, 1
      %p124 = por %p122, %p123
      %p125 = scmp.ne.s32.totalorder %s116, %s117
      %p126 = scmp.eq.s32.totalorder %s22, 0
      %p127 = por %p125, %p126
      %p128 = scmp.ne.s32.totalorder %s116, %s117
      %p129 = scmp.eq.s32.totalorder %s23, 1
      %p130 = por %p128, %p129
      %p132 = scmp.ne.s32.totalorder %s117, %s131
      %p133 = scmp.eq.s32.totalorder %s23, 0
      %p134 = por %p132, %p133
      %s136 = sadd.s32 %s135, 1
      %p139 = scmp.eq.s32.totalorder %s17, 1
      %p140 = scmp.ne.s32.totalorder %s135, %s137
      %p141 = scmp.eq.s32.totalorder %s17, 0
      %p142 = por %p140, %p141
      %p143 = scmp.ne.s32.totalorder %s135, %s137
      %p144 = scmp.eq.s32.totalorder %s22, 1
      %p145 = por %p143, %p144
      %p146 = scmp.ne.s32.totalorder %s137, %s138
      %p147 = scmp.eq.s32.totalorder %s22, 0
      %p148 = por %p146, %p147
      %p149 = scmp.ne.s32.totalorder %s137, %s138
      %p150 = scmp.eq.s32.totalorder %s23, 1
      %p151 = por %p149, %p150
      %p153 = scmp.ne.s32.totalorder %s138, %s152
      %p154 = scmp.eq.s32.totalorder %s23, 0
      %p155 = por %p153, %p154
      %s157 = sadd.s32 %s156, 1
      %p160 = scmp.eq.s32.totalorder %s17, 1
      %p161 = scmp.ne.s32.totalorder %s156, %s158
      %p162 = scmp.eq.s32.totalorder %s17, 0
      %p163 = por %p161, %p162
      %p164 = scmp.ne.s32.totalorder %s156, %s158
      %p165 = scmp.eq.s32.totalorder %s22, 1
      %p166 = por %p164, %p165
      %p167 = scmp.ne.s32.totalorder %s158, %s159
      %p168 = scmp.eq.s32.totalorder %s22, 0
      %p169 = por %p167, %p168
      %p170 = scmp.ne.s32.totalorder %s158, %s159
      %p171 = scmp.eq.s32.totalorder %s23, 1
      %p172 = por %p170, %p171
      %p174 = scmp.ne.s32.totalorder %s159, %s173
      %p175 = scmp.eq.s32.totalorder %s23, 0
      %p176 = por %p174, %p175
      %s177 = ssub.s32 %s17, %s24
      %p178 = scmp.eq.s32.totalorder %s177, 0
      %s180 = sadd.s32 %s179, 1
      %s181 = scalar_select %p178, %s179, %s180
      %p184 = pneg %p178
      %p185 = scmp.eq.s32.totalorder %s17, 1
      %p186 = por %p184, %p185
      %p187 = scmp.ne.s32.totalorder %s179, %s182
      %p188 = scmp.eq.s32.totalorder %s17, 0
      %p189 = por %p187, %p188
      %p190 = scmp.ne.s32.totalorder %s179, %s182
      %p191 = scmp.eq.s32.totalorder %s22, 1
      %p192 = por %p190, %p191
      %p193 = scmp.ne.s32.totalorder %s182, %s183
      %p194 = scmp.eq.s32.totalorder %s22, 0
      %p195 = por %p193, %p194
      %p196 = scmp.ne.s32.totalorder %s182, %s183
      %p197 = scmp.eq.s32.totalorder %s23, 1
      %p198 = por %p196, %p197
      %p200 = scmp.ne.s32.totalorder %s183, %s199
      %p201 = scmp.eq.s32.totalorder %s23, 0
      %p202 = por %p200, %p201
      %p203 = scmp.le.s32.totalorder 1, %s17
      %p204 = scmp.lt.s32.totalorder %s17, 3
      %p205 = pnand %p203, %p204
      %p206 = pneg %p205
      // Predicated region
      $region9: #{safe_critic_forward.1} parent=5 // pred_check
        _
      $region10: #{safe_critic_forward.1} parent=5 // pred_check_branch
        %208 = sbr.rel (%p205) target = $region12
      $region11: #{safe_critic_forward.1} parent=5 // pred_region
        %s209 = ssub.s32 %s17, 1
        // Predicated region
        $region13: #{safe_critic_forward.1} parent=11 // pred_check
          %p210 = pneg %p64
        $region14: #{safe_critic_forward.1} parent=11 // pred_check_branch
          %212 = sbr.rel (%p210) target = $region16
        $region15: #{safe_critic_forward.1} parent=11 // pred_region
          %214 = vsyncadd [#allocation4], 0
          %s215 = sshll.u32 %s1, 4
          %s216 = int_to_ptr.hbm [resolvable:$true] %s215
          %s217 = sshll.u32 [#allocation3], 4
          %s218 = int_to_ptr.vmem [resolvable:$true] %s217
          %223 = dma.hbm_to_vmem [thread:$0]  %s216, 3072, %s218, [#allocation4], 192, 192, 12
        $region16: #{safe_critic_forward.1} parent=11 // pred_fallthru
          _
        // Predicated region
        $region17: #{safe_critic_forward.1} parent=11 // pred_check
          %p224 = pneg %p85
        $region18: #{safe_critic_forward.1} parent=11 // pred_check_branch
          %226 = sbr.rel (%p224) target = $region20
        $region19: #{safe_critic_forward.1} parent=11 // pred_region
          _
        $region20: #{safe_critic_forward.1} parent=11 // pred_fallthru
          _
        // Predicated region
        $region21: #{safe_critic_forward.1} parent=11 // pred_check
          %p227 = pneg %p106
        $region22: #{safe_critic_forward.1} parent=11 // pred_check_branch
          %229 = sbr.rel (%p227) target = $region24
        $region23: #{safe_critic_forward.1} parent=11 // pred_region
          %231 = vsyncadd [#allocation6], 0
          %s232 = sshll.u32 %s3, 4
          %s233 = int_to_ptr.hbm [resolvable:$true] %s232
          %s234 = sshll.u32 [#allocation5], 4
          %s235 = int_to_ptr.vmem [resolvable:$true] %s234
          %240 = dma.hbm_to_vmem [thread:$0]  %s233, 9216, %s235, [#allocation6], 192, 192, 12
        $region24: #{safe_critic_forward.1} parent=11 // pred_fallthru
          _
        // Predicated region
        $region25: #{safe_critic_forward.1} parent=11 // pred_check
          %p241 = pneg %p127
        $region26: #{safe_critic_forward.1} parent=11 // pred_check_branch
          %243 = sbr.rel (%p241) target = $region28
        $region27: #{safe_critic_forward.1} parent=11 // pred_region
          _
        $region28: #{safe_critic_forward.1} parent=11 // pred_fallthru
          _
        // Predicated region
        $region29: #{safe_critic_forward.1} parent=11 // pred_check
          %p244 = pneg %p148
        $region30: #{safe_critic_forward.1} parent=11 // pred_check_branch
          %246 = sbr.rel (%p244) target = $region32
        $region31: #{safe_critic_forward.1} parent=11 // pred_region
          %248 = vsyncadd [#allocation6], 0
          %s249 = sshll.u32 %s5, 4
          %s250 = int_to_ptr.hbm [resolvable:$true] %s249
          %s251 = sshll.u32 [#allocation7], 4
          %s252 = int_to_ptr.vmem [resolvable:$true] %s251
          %257 = dma.hbm_to_vmem [thread:$0]  %s250, 3072, %s252, [#allocation6], 64, 64, 4
        $region32: #{safe_critic_forward.1} parent=11 // pred_fallthru
          _
        // Predicated region
        $region33: #{safe_critic_forward.1} parent=11 // pred_check
          %p258 = pneg %p169
        $region34: #{safe_critic_forward.1} parent=11 // pred_check_branch
          %260 = sbr.rel (%p258) target = $region36
        $region35: #{safe_critic_forward.1} parent=11 // pred_region
          _
        $region36: #{safe_critic_forward.1} parent=11 // pred_fallthru
          _
      $region12: #{safe_critic_forward.1} parent=5 // pred_fallthru
        _
      %p261 = scmp.lt.s32.totalorder %s17, 2
      // Predicated region
      $region37: #{safe_critic_forward.1} parent=5 // pred_check
        %p262 = pneg %p261
      $region38: #{safe_critic_forward.1} parent=5 // pred_check_branch
        %264 = sbr.rel (%p262) target = $region40
      $region39: #{safe_critic_forward.1} parent=5 // pred_region
        // Predicated region
        $region41: #{safe_critic_forward.1} parent=39 // pred_check
          %p265 = pneg %p37
        $region42: #{safe_critic_forward.1} parent=39 // pred_check_branch
          %267 = sbr.rel (%p265) target = $region44
        $region43: #{safe_critic_forward.1} parent=39 // pred_region
          %p268 = scmp.lt.s32.totalorder %s17, 1
          %s269 = scalar_select %p268, %s17, 1
          %s270 = smul.addr %s269, 4
          %s271 = scalar_lea.vmem %s0, %s270
        $region44: #{safe_critic_forward.1} parent=39 // pred_fallthru
          _
      $region40: #{safe_critic_forward.1} parent=5 // pred_fallthru
        _
      %p272 = scmp.le.s32.totalorder 1, %s17
      %p273 = scmp.lt.s32.totalorder %s17, 3
      %p274 = pnand %p272, %p273
      %p275 = pneg %p274
      // Predicated region
      $region45: #{safe_critic_forward.1} parent=5 // pred_check
        _
      $region46: #{safe_critic_forward.1} parent=5 // pred_check_branch
        %277 = sbr.rel (%p274) target = $region48
      $region47: #{safe_critic_forward.1} parent=5 // pred_region
        %s278 = ssub.s32 %s17, 1
        // Predicated region
        $region49: #{safe_critic_forward.1} parent=47 // pred_check
          %p279 = pneg %p64
        $region50: #{safe_critic_forward.1} parent=47 // pred_check_branch
          %281 = sbr.rel (%p279) target = $region52
        $region51: #{safe_critic_forward.1} parent=47 // pred_region
          %283 = dma.done [#allocation4], 3072
        $region52: #{safe_critic_forward.1} parent=47 // pred_fallthru
          _
        // Predicated region
        $region53: #{safe_critic_forward.1} parent=47 // pred_check
          %p284 = pneg %p106
        $region54: #{safe_critic_forward.1} parent=47 // pred_check_branch
          %286 = sbr.rel (%p284) target = $region56
        $region55: #{safe_critic_forward.1} parent=47 // pred_region
          %288 = dma.done [#allocation6], 9216
        $region56: #{safe_critic_forward.1} parent=47 // pred_fallthru
          _
        // Predicated region
        $region57: #{safe_critic_forward.1} parent=47 // pred_check
          %p289 = pneg %p148
        $region58: #{safe_critic_forward.1} parent=47 // pred_check_branch
          %291 = sbr.rel (%p289) target = $region60
        $region59: #{safe_critic_forward.1} parent=47 // pred_region
          %293 = dma.done [#allocation6], 3072
        $region60: #{safe_critic_forward.1} parent=47 // pred_fallthru
          _
        %p294 = scmp.lt.s32.totalorder %s22, 1
        %s295 = scalar_select %p294, %s22, 1
        %s296 = smul.addr %s295, 4
        %s297 = scalar_lea.vmem %s0, %s296
        %p298 = pneg %p43
        %p299 = pneg %p40
        %p300 = pneg %p64
        %p301 = pneg %p61
        %p302 = pneg %p85
        %p303 = pneg %p82
        %p304 = pneg %p106
        %p305 = pneg %p103
        %p306 = pneg %p127
        %p307 = pneg %p124
        %p308 = pneg %p148
        %p309 = pneg %p145
        %p310 = pneg %p169
        %p311 = pneg %p166
        %p312 = pneg %p195
        %p313 = pneg %p192
        %p314 = scmp.lt.s32.totalorder %s22, 1
        %s315 = scalar_select %p314, %s22, 1
        %s316 = smul.addr %s315, 8
        %s317 = scalar_lea.vmem %s7, %s316
        %p318 = scmp.lt.s32.totalorder %s22, 1
        %s319 = scalar_select %p318, %s22, 1
        %s320 = smul.addr %s319, 4
        %s321 = scalar_lea.vmem %s0, %s320
        %p322 = scmp.lt.s32.totalorder %s22, 1
        %s323 = scalar_select %p322, %s22, 1
        %s324 = smul.addr %s323, 8
        %s325 = scalar_lea.vmem %s7, %s324
        %v326 = vld [vmem:[%s321] sm:$0xf]
        %v327 = vld [vmem:[#allocation3] sm:$0xff]
        %v328 = vld [vmem:[#allocation3 + $0x8] sm:$0xf]
        %v329 = vld [vmem:[#allocation3 + $0xc] sm:$0xff]
        %v330 = vld [vmem:[#allocation3 + $0x14] sm:$0xf]
        %v331 = vld [vmem:[#allocation3 + $0x18] sm:$0xff]
        %v332 = vld [vmem:[#allocation3 + $0x20] sm:$0xf]
        %v333 = vld [vmem:[#allocation3 + $0x24] sm:$0xff]
        %v334 = vld [vmem:[#allocation3 + $0x2c] sm:$0xf]
        %v335 = vld [vmem:[#allocation3 + $0x30] sm:$0xff]
        %v336 = vld [vmem:[#allocation3 + $0x38] sm:$0xf]
        %v337 = vld [vmem:[#allocation3 + $0x3c] sm:$0xff]
        %v338 = vld [vmem:[#allocation3 + $0x44] sm:$0xf]
        %v339 = vld [vmem:[#allocation3 + $0x48] sm:$0xff]
        %v340 = vld [vmem:[#allocation3 + $0x50] sm:$0xf]
        %v341 = vld [vmem:[#allocation3 + $0x54] sm:$0xff]
        %v342 = vld [vmem:[#allocation3 + $0x5c] sm:$0xf]
        %v343 = vld [vmem:[#allocation3 + $0x60] sm:$0xff]
        %v344 = vld [vmem:[#allocation3 + $0x68] sm:$0xf]
        %v345 = vld [vmem:[#allocation3 + $0x6c] sm:$0xff]
        %v346 = vld [vmem:[#allocation3 + $0x74] sm:$0xf]
        %v347 = vld [vmem:[#allocation3 + $0x78] sm:$0xff]
        %v348 = vld [vmem:[#allocation3 + $0x80] sm:$0xf]
        %v349 = vld [vmem:[#allocation3 + $0x84] sm:$0xff]
        %v350 = vld [vmem:[#allocation3 + $0x8c] sm:$0xf]
        %v351 = vld [vmem:[#allocation3 + $0x90] sm:$0xff]
        %v352 = vld [vmem:[#allocation3 + $0x98] sm:$0xf]
        %v353 = vld [vmem:[#allocation3 + $0x9c] sm:$0xff]
        %v354 = vld [vmem:[#allocation3 + $0xa4] sm:$0xf]
        %v355 = vld [vmem:[#allocation3 + $0xa8] sm:$0xff]
        %v356 = vld [vmem:[#allocation3 + $0xb0] sm:$0xf]
        %v357 = vld [vmem:[#allocation3 + $0xb4] sm:$0xff]
        %v358 = vld [vmem:[#allocation3 + $0xbc] sm:$0xf]
        %v359 = vld [vmem:[%s2] sm:$0x7]
        %v361 = vperm.slane %v359, 0
        %v362 = vperm.slane %v359, 1
        %v363 = vperm.slane %v359, 2
        %v399 = vunpack.c.l.b16 %v327
        %v400 = vunpack.c.h.b16 %v327
        %v401 = vunpack.c.l.b16 %v328
        %v402 = vunpack.c.l.b16 %v329
        %v403 = vunpack.c.h.b16 %v329
        %v404 = vunpack.c.l.b16 %v330
        %v405 = vunpack.c.l.b16 %v331
        %v406 = vunpack.c.h.b16 %v331
        %v407 = vunpack.c.l.b16 %v332
        %v408 = vunpack.c.l.b16 %v333
        %v409 = vunpack.c.h.b16 %v333
        %v410 = vunpack.c.l.b16 %v334
        %v411 = vunpack.c.l.b16 %v335
        %v412 = vunpack.c.h.b16 %v335
        %v413 = vunpack.c.l.b16 %v336
        %v414 = vunpack.c.l.b16 %v337
        %v415 = vunpack.c.h.b16 %v337
        %v416 = vunpack.c.l.b16 %v338
        %v417 = vunpack.c.l.b16 %v339
        %v418 = vunpack.c.h.b16 %v339
        %v419 = vunpack.c.l.b16 %v340
        %v420 = vunpack.c.l.b16 %v341
        %v421 = vunpack.c.h.b16 %v341
        %v422 = vunpack.c.l.b16 %v342
        %v423 = vunpack.c.l.b16 %v343
        %v424 = vunpack.c.h.b16 %v343
        %v425 = vunpack.c.l.b16 %v344
        %v426 = vunpack.c.l.b16 %v345
        %v427 = vunpack.c.h.b16 %v345
        %v428 = vunpack.c.l.b16 %v346
        %v429 = vunpack.c.l.b16 %v347
        %v430 = vunpack.c.h.b16 %v347
        %v431 = vunpack.c.l.b16 %v348
        %v432 = vunpack.c.l.b16 %v349
        %v433 = vunpack.c.h.b16 %v349
        %v434 = vunpack.c.l.b16 %v350
        %v435 = vunpack.c.l.b16 %v351
        %v436 = vunpack.c.h.b16 %v351
        %v437 = vunpack.c.l.b16 %v352
        %v438 = vunpack.c.l.b16 %v353
        %v439 = vunpack.c.h.b16 %v353
        %v440 = vunpack.c.l.b16 %v354
        %v441 = vunpack.c.l.b16 %v355
        %v442 = vunpack.c.h.b16 %v355
        %v443 = vunpack.c.l.b16 %v356
        %v444 = vunpack.c.l.b16 %v357
        %v445 = vunpack.c.h.b16 %v357
        %v446 = vunpack.c.l.b16 %v358
        %v447 = vpack.c.b16 %v402, %v399
        %v448 = vpack.c.b16 %v403, %v400
        %v449 = vpack.c.b16 %v404, %v401
        %v450 = vpack.c.b16 %v408, %v405
        %v451 = vpack.c.b16 %v409, %v406
        %v452 = vpack.c.b16 %v410, %v407
        %v453 = vpack.c.b16 %v414, %v411
        %v454 = vpack.c.b16 %v415, %v412
        %v455 = vpack.c.b16 %v416, %v413
        %v456 = vpack.c.b16 %v420, %v417
        %v457 = vpack.c.b16 %v421, %v418
        %v458 = vpack.c.b16 %v422, %v419
        %v459 = vpack.c.b16 %v426, %v423
        %v460 = vpack.c.b16 %v427, %v424
        %v461 = vpack.c.b16 %v428, %v425
        %v462 = vpack.c.b16 %v432, %v429
        %v463 = vpack.c.b16 %v433, %v430
        %v464 = vpack.c.b16 %v434, %v431
        %v465 = vpack.c.b16 %v438, %v435
        %v466 = vpack.c.b16 %v439, %v436
        %v467 = vpack.c.b16 %v440, %v437
        %v468 = vpack.c.b16 %v444, %v441
        %v469 = vpack.c.b16 %v445, %v442
        %v470 = vpack.c.b16 %v446, %v443
        %495 = vmatpush.bf16.msra.mxu0 %v468
        %496 = vmatpush.bf16.msra.mxu0 %v465
        %497 = vmatpush.bf16.msra.mxu0 %v462
        %498 = vmatpush.bf16.msra.mxu0 %v459
        %499 = vmatpush.bf16.msra.mxu0 %v456
        %500 = vmatpush.bf16.msra.mxu0 %v453
        %501 = vmatpush.bf16.msra.mxu0 %v450
        %502 = vmatpush.bf16.msra.mxu0 %v447
        %503 = vmatmul.bf16.gmra.mxu0 %v326
        %v504 = vpop.f32.mrf.mxu0
        %v505 = vadd.f32 %v361, %v504
        %v506 = vpop.f32.mrf.mxu0
        %507 = vdwg.mxu0
        %508 = vmatpush.bf16.msra.mxu0 %v469
        %509 = vmatpush.bf16.msra.mxu0 %v466
        %510 = vmatpush.bf16.msra.mxu0 %v463
        %511 = vmatpush.bf16.msra.mxu0 %v460
        %512 = vmatpush.bf16.msra.mxu0 %v457
        %513 = vmatpush.bf16.msra.mxu0 %v454
        %514 = vmatpush.bf16.msra.mxu0 %v451
        %515 = vmatpush.bf16.msra.mxu0 %v448
        %516 = vmatmul.bf16.gmra.mxu0 %v326
        %v517 = vpop.f32.mrf.mxu0
        %v518 = vadd.f32 %v362, %v517
        %v519 = vpop.f32.mrf.mxu0
        %520 = vdwg.mxu0
        %521 = vmatpush.bf16.msra.mxu0 %v470
        %522 = vmatpush.bf16.msra.mxu0 %v467
        %523 = vmatpush.bf16.msra.mxu0 %v464
        %524 = vmatpush.bf16.msra.mxu0 %v461
        %525 = vmatpush.bf16.msra.mxu0 %v458
        %526 = vmatpush.bf16.msra.mxu0 %v455
        %527 = vmatpush.bf16.msra.mxu0 %v452
        %528 = vmatpush.bf16.msra.mxu0 %v449
        %529 = vmatmul.bf16.gmra.mxu0 %v326
        %v530 = vpop.f32.mrf.mxu0
        %v531 = vadd.f32 %v363, %v530
        %v532 = vpop.f32.mrf.mxu0
        %533 = vdwg.mxu0
        %v534 = vpack.c.bf16 %v518, %v505
        %v535 = vpack.c.bf16 %v531, %v531
        %v536 = vunpack.c.l.bf16 %v534
        %v537 = vunpack.c.h.bf16 %v534
        %v538 = vunpack.c.l.bf16 %v535
        %v539 = vmax.f32 %v536, 0.0
        %v540 = vmax.f32 %v537, 0.0
        %v541 = vmax.f32 %v538, 0.0
        %v542 = vpack.c.bf16 %v539, %v539
        %v543 = vpack.c.bf16 %v540, %v540
        %v544 = vpack.c.bf16 %v541, %v541
        %v545 = vld [vmem:[#allocation5] sm:$0xff]
        %v546 = vld [vmem:[#allocation5 + $0x8] sm:$0xf]
        %v547 = vld [vmem:[#allocation5 + $0xc] sm:$0xff]
        %v548 = vld [vmem:[#allocation5 + $0x14] sm:$0xf]
        %v549 = vld [vmem:[#allocation5 + $0x18] sm:$0xff]
        %v550 = vld [vmem:[#allocation5 + $0x20] sm:$0xf]
        %v551 = vld [vmem:[#allocation5 + $0x24] sm:$0xff]
        %v552 = vld [vmem:[#allocation5 + $0x2c] sm:$0xf]
        %v553 = vld [vmem:[#allocation5 + $0x30] sm:$0xff]
        %v554 = vld [vmem:[#allocation5 + $0x38] sm:$0xf]
        %v555 = vld [vmem:[#allocation5 + $0x3c] sm:$0xff]
        %v556 = vld [vmem:[#allocation5 + $0x44] sm:$0xf]
        %v557 = vld [vmem:[#allocation5 + $0x48] sm:$0xff]
        %v558 = vld [vmem:[#allocation5 + $0x50] sm:$0xf]
        %v559 = vld [vmem:[#allocation5 + $0x54] sm:$0xff]
        %v560 = vld [vmem:[#allocation5 + $0x5c] sm:$0xf]
        %v561 = vld [vmem:[#allocation5 + $0x60] sm:$0xff]
        %v562 = vld [vmem:[#allocation5 + $0x68] sm:$0xf]
        %v563 = vld [vmem:[#allocation5 + $0x6c] sm:$0xff]
        %v564 = vld [vmem:[#allocation5 + $0x74] sm:$0xf]
        %v565 = vld [vmem:[#allocation5 + $0x78] sm:$0xff]
        %v566 = vld [vmem:[#allocation5 + $0x80] sm:$0xf]
        %v567 = vld [vmem:[#allocation5 + $0x84] sm:$0xff]
        %v568 = vld [vmem:[#allocation5 + $0x8c] sm:$0xf]
        %v569 = vld [vmem:[#allocation5 + $0x90] sm:$0xff]
        %v570 = vld [vmem:[#allocation5 + $0x98] sm:$0xf]
        %v571 = vld [vmem:[#allocation5 + $0x9c] sm:$0xff]
        %v572 = vld [vmem:[#allocation5 + $0xa4] sm:$0xf]
        %v573 = vld [vmem:[#allocation5 + $0xa8] sm:$0xff]
        %v574 = vld [vmem:[#allocation5 + $0xb0] sm:$0xf]
        %v575 = vld [vmem:[#allocation5 + $0xb4] sm:$0xff]
        %v576 = vld [vmem:[#allocation5 + $0xbc] sm:$0xf]
        %v577 = vld [vmem:[#allocation5 + $0xc0] sm:$0xff]
        %v578 = vld [vmem:[#allocation5 + $0xc8] sm:$0xf]
        %v579 = vld [vmem:[#allocation5 + $0xcc] sm:$0xff]
        %v580 = vld [vmem:[#allocation5 + $0xd4] sm:$0xf]
        %v581 = vld [vmem:[#allocation5 + $0xd8] sm:$0xff]
        %v582 = vld [vmem:[#allocation5 + $0xe0] sm:$0xf]
        %v583 = vld [vmem:[#allocation5 + $0xe4] sm:$0xff]
        %v584 = vld [vmem:[#allocation5 + $0xec] sm:$0xf]
        %v585 = vld [vmem:[#allocation5 + $0xf0] sm:$0xff]
        %v586 = vld [vmem:[#allocation5 + $0xf8] sm:$0xf]
        %v587 = vld [vmem:[#allocation5 + $0xfc] sm:$0xff]
        %v588 = vld [vmem:[#allocation5 + $0x104] sm:$0xf]
        %v589 = vld [vmem:[#allocation5 + $0x108] sm:$0xff]
        %v590 = vld [vmem:[#allocation5 + $0x110] sm:$0xf]
        %v591 = vld [vmem:[#allocation5 + $0x114] sm:$0xff]
        %v592 = vld [vmem:[#allocation5 + $0x11c] sm:$0xf]
        %v593 = vld [vmem:[#allocation5 + $0x120] sm:$0xff]
        %v594 = vld [vmem:[#allocation5 + $0x128] sm:$0xf]
        %v595 = vld [vmem:[#allocation5 + $0x12c] sm:$0xff]
        %v596 = vld [vmem:[#allocation5 + $0x134] sm:$0xf]
        %v597 = vld [vmem:[#allocation5 + $0x138] sm:$0xff]
        %v598 = vld [vmem:[#allocation5 + $0x140] sm:$0xf]
        %v599 = vld [vmem:[#allocation5 + $0x144] sm:$0xff]
        %v600 = vld [vmem:[#allocation5 + $0x14c] sm:$0xf]
        %v601 = vld [vmem:[#allocation5 + $0x150] sm:$0xff]
        %v602 = vld [vmem:[#allocation5 + $0x158] sm:$0xf]
        %v603 = vld [vmem:[#allocation5 + $0x15c] sm:$0xff]
        %v604 = vld [vmem:[#allocation5 + $0x164] sm:$0xf]
        %v605 = vld [vmem:[#allocation5 + $0x168] sm:$0xff]
        %v606 = vld [vmem:[#allocation5 + $0x170] sm:$0xf]
        %v607 = vld [vmem:[#allocation5 + $0x174] sm:$0xff]
        %v608 = vld [vmem:[#allocation5 + $0x17c] sm:$0xf]
        %v609 = vld [vmem:[#allocation5 + $0x180] sm:$0xff]
        %v610 = vld [vmem:[#allocation5 + $0x188] sm:$0xf]
        %v611 = vld [vmem:[#allocation5 + $0x18c] sm:$0xff]
        %v612 = vld [vmem:[#allocation5 + $0x194] sm:$0xf]
        %v613 = vld [vmem:[#allocation5 + $0x198] sm:$0xff]
        %v614 = vld [vmem:[#allocation5 + $0x1a0] sm:$0xf]
        %v615 = vld [vmem:[#allocation5 + $0x1a4] sm:$0xff]
        %v616 = vld [vmem:[#allocation5 + $0x1ac] sm:$0xf]
        %v617 = vld [vmem:[#allocation5 + $0x1b0] sm:$0xff]
        %v618 = vld [vmem:[#allocation5 + $0x1b8] sm:$0xf]
        %v619 = vld [vmem:[#allocation5 + $0x1bc] sm:$0xff]
        %v620 = vld [vmem:[#allocation5 + $0x1c4] sm:$0xf]
        %v621 = vld [vmem:[#allocation5 + $0x1c8] sm:$0xff]
        %v622 = vld [vmem:[#allocation5 + $0x1d0] sm:$0xf]
        %v623 = vld [vmem:[#allocation5 + $0x1d4] sm:$0xff]
        %v624 = vld [vmem:[#allocation5 + $0x1dc] sm:$0xf]
        %v625 = vld [vmem:[#allocation5 + $0x1e0] sm:$0xff]
        %v626 = vld [vmem:[#allocation5 + $0x1e8] sm:$0xf]
        %v627 = vld [vmem:[#allocation5 + $0x1ec] sm:$0xff]
        %v628 = vld [vmem:[#allocation5 + $0x1f4] sm:$0xf]
        %v629 = vld [vmem:[#allocation5 + $0x1f8] sm:$0xff]
        %v630 = vld [vmem:[#allocation5 + $0x200] sm:$0xf]
        %v631 = vld [vmem:[#allocation5 + $0x204] sm:$0xff]
        %v632 = vld [vmem:[#allocation5 + $0x20c] sm:$0xf]
        %v633 = vld [vmem:[#allocation5 + $0x210] sm:$0xff]
        %v634 = vld [vmem:[#allocation5 + $0x218] sm:$0xf]
        %v635 = vld [vmem:[#allocation5 + $0x21c] sm:$0xff]
        %v636 = vld [vmem:[#allocation5 + $0x224] sm:$0xf]
        %v637 = vld [vmem:[#allocation5 + $0x228] sm:$0xff]
        %v638 = vld [vmem:[#allocation5 + $0x230] sm:$0xf]
        %v639 = vld [vmem:[#allocation5 + $0x234] sm:$0xff]
        %v640 = vld [vmem:[#allocation5 + $0x23c] sm:$0xf]
        %v641 = vld [vmem:[%s4] sm:$0x7]
        %v643 = vperm.slane %v641, 0
        %v644 = vperm.slane %v641, 1
        %v645 = vperm.slane %v641, 2
        %v745 = vunpack.c.l.b16 %v545
        %v746 = vunpack.c.h.b16 %v545
        %v747 = vunpack.c.l.b16 %v546
        %v748 = vunpack.c.l.b16 %v547
        %v749 = vunpack.c.h.b16 %v547
        %v750 = vunpack.c.l.b16 %v548
        %v751 = vunpack.c.l.b16 %v549
        %v752 = vunpack.c.h.b16 %v549
        %v753 = vunpack.c.l.b16 %v550
        %v754 = vunpack.c.l.b16 %v551
        %v755 = vunpack.c.h.b16 %v551
        %v756 = vunpack.c.l.b16 %v552
        %v757 = vunpack.c.l.b16 %v553
        %v758 = vunpack.c.h.b16 %v553
        %v759 = vunpack.c.l.b16 %v554
        %v760 = vunpack.c.l.b16 %v555
        %v761 = vunpack.c.h.b16 %v555
        %v762 = vunpack.c.l.b16 %v556
        %v763 = vunpack.c.l.b16 %v557
        %v764 = vunpack.c.h.b16 %v557
        %v765 = vunpack.c.l.b16 %v558
        %v766 = vunpack.c.l.b16 %v559
        %v767 = vunpack.c.h.b16 %v559
        %v768 = vunpack.c.l.b16 %v560
        %v769 = vunpack.c.l.b16 %v561
        %v770 = vunpack.c.h.b16 %v561
        %v771 = vunpack.c.l.b16 %v562
        %v772 = vunpack.c.l.b16 %v563
        %v773 = vunpack.c.h.b16 %v563
        %v774 = vunpack.c.l.b16 %v564
        %v775 = vunpack.c.l.b16 %v565
        %v776 = vunpack.c.h.b16 %v565
        %v777 = vunpack.c.l.b16 %v566
        %v778 = vunpack.c.l.b16 %v567
        %v779 = vunpack.c.h.b16 %v567
        %v780 = vunpack.c.l.b16 %v568
        %v781 = vunpack.c.l.b16 %v569
        %v782 = vunpack.c.h.b16 %v569
        %v783 = vunpack.c.l.b16 %v570
        %v784 = vunpack.c.l.b16 %v571
        %v785 = vunpack.c.h.b16 %v571
        %v786 = vunpack.c.l.b16 %v572
        %v787 = vunpack.c.l.b16 %v573
        %v788 = vunpack.c.h.b16 %v573
        %v789 = vunpack.c.l.b16 %v574
        %v790 = vunpack.c.l.b16 %v575
        %v791 = vunpack.c.h.b16 %v575
        %v792 = vunpack.c.l.b16 %v576
        %v793 = vunpack.c.l.b16 %v577
        %v794 = vunpack.c.h.b16 %v577
        %v795 = vunpack.c.l.b16 %v578
        %v796 = vunpack.c.l.b16 %v579
        %v797 = vunpack.c.h.b16 %v579
        %v798 = vunpack.c.l.b16 %v580
        %v799 = vunpack.c.l.b16 %v581
        %v800 = vunpack.c.h.b16 %v581
        %v801 = vunpack.c.l.b16 %v582
        %v802 = vunpack.c.l.b16 %v583
        %v803 = vunpack.c.h.b16 %v583
        %v804 = vunpack.c.l.b16 %v584
        %v805 = vunpack.c.l.b16 %v585
        %v806 = vunpack.c.h.b16 %v585
        %v807 = vunpack.c.l.b16 %v586
        %v808 = vunpack.c.l.b16 %v587
        %v809 = vunpack.c.h.b16 %v587
        %v810 = vunpack.c.l.b16 %v588
        %v811 = vunpack.c.l.b16 %v589
        %v812 = vunpack.c.h.b16 %v589
        %v813 = vunpack.c.l.b16 %v590
        %v814 = vunpack.c.l.b16 %v591
        %v815 = vunpack.c.h.b16 %v591
        %v816 = vunpack.c.l.b16 %v592
        %v817 = vunpack.c.l.b16 %v593
        %v818 = vunpack.c.h.b16 %v593
        %v819 = vunpack.c.l.b16 %v594
        %v820 = vunpack.c.l.b16 %v595
        %v821 = vunpack.c.h.b16 %v595
        %v822 = vunpack.c.l.b16 %v596
        %v823 = vunpack.c.l.b16 %v597
        %v824 = vunpack.c.h.b16 %v597
        %v825 = vunpack.c.l.b16 %v598
        %v826 = vunpack.c.l.b16 %v599
        %v827 = vunpack.c.h.b16 %v599
        %v828 = vunpack.c.l.b16 %v600
        %v829 = vunpack.c.l.b16 %v601
        %v830 = vunpack.c.h.b16 %v601
        %v831 = vunpack.c.l.b16 %v602
        %v832 = vunpack.c.l.b16 %v603
        %v833 = vunpack.c.h.b16 %v603
        %v834 = vunpack.c.l.b16 %v604
        %v835 = vunpack.c.l.b16 %v605
        %v836 = vunpack.c.h.b16 %v605
        %v837 = vunpack.c.l.b16 %v606
        %v838 = vunpack.c.l.b16 %v607
        %v839 = vunpack.c.h.b16 %v607
        %v840 = vunpack.c.l.b16 %v608
        %v841 = vunpack.c.l.b16 %v609
        %v842 = vunpack.c.h.b16 %v609
        %v843 = vunpack.c.l.b16 %v610
        %v844 = vunpack.c.l.b16 %v611
        %v845 = vunpack.c.h.b16 %v611
        %v846 = vunpack.c.l.b16 %v612
        %v847 = vunpack.c.l.b16 %v613
        %v848 = vunpack.c.h.b16 %v613
        %v849 = vunpack.c.l.b16 %v614
        %v850 = vunpack.c.l.b16 %v615
        %v851 = vunpack.c.h.b16 %v615
        %v852 = vunpack.c.l.b16 %v616
        %v853 = vunpack.c.l.b16 %v617
        %v854 = vunpack.c.h.b16 %v617
        %v855 = vunpack.c.l.b16 %v618
        %v856 = vunpack.c.l.b16 %v619
        %v857 = vunpack.c.h.b16 %v619
        %v858 = vunpack.c.l.b16 %v620
        %v859 = vunpack.c.l.b16 %v621
        %v860 = vunpack.c.h.b16 %v621
        %v861 = vunpack.c.l.b16 %v622
        %v862 = vunpack.c.l.b16 %v623
        %v863 = vunpack.c.h.b16 %v623
        %v864 = vunpack.c.l.b16 %v624
        %v865 = vunpack.c.l.b16 %v625
        %v866 = vunpack.c.h.b16 %v625
        %v867 = vunpack.c.l.b16 %v626
        %v868 = vunpack.c.l.b16 %v627
        %v869 = vunpack.c.h.b16 %v627
        %v870 = vunpack.c.l.b16 %v628
        %v871 = vunpack.c.l.b16 %v629
        %v872 = vunpack.c.h.b16 %v629
        %v873 = vunpack.c.l.b16 %v630
        %v874 = vunpack.c.l.b16 %v631
        %v875 = vunpack.c.h.b16 %v631
        %v876 = vunpack.c.l.b16 %v632
        %v877 = vunpack.c.l.b16 %v633
        %v878 = vunpack.c.h.b16 %v633
        %v879 = vunpack.c.l.b16 %v634
        %v880 = vunpack.c.l.b16 %v635
        %v881 = vunpack.c.h.b16 %v635
        %v882 = vunpack.c.l.b16 %v636
        %v883 = vunpack.c.l.b16 %v637
        %v884 = vunpack.c.h.b16 %v637
        %v885 = vunpack.c.l.b16 %v638
        %v886 = vunpack.c.l.b16 %v639
        %v887 = vunpack.c.h.b16 %v639
        %v888 = vunpack.c.l.b16 %v640
        %v889 = vpack.c.b16 %v748, %v745
        %v890 = vpack.c.b16 %v749, %v746
        %v891 = vpack.c.b16 %v750, %v747
        %v892 = vpack.c.b16 %v754, %v751
        %v893 = vpack.c.b16 %v755, %v752
        %v894 = vpack.c.b16 %v756, %v753
        %v895 = vpack.c.b16 %v760, %v757
        %v896 = vpack.c.b16 %v761, %v758
        %v897 = vpack.c.b16 %v762, %v759
        %v898 = vpack.c.b16 %v766, %v763
        %v899 = vpack.c.b16 %v767, %v764
        %v900 = vpack.c.b16 %v768, %v765
        %v901 = vpack.c.b16 %v772, %v769
        %v902 = vpack.c.b16 %v773, %v770
        %v903 = vpack.c.b16 %v774, %v771
        %v904 = vpack.c.b16 %v778, %v775
        %v905 = vpack.c.b16 %v779, %v776
        %v906 = vpack.c.b16 %v780, %v777
        %v907 = vpack.c.b16 %v784, %v781
        %v908 = vpack.c.b16 %v785, %v782
        %v909 = vpack.c.b16 %v786, %v783
        %v910 = vpack.c.b16 %v790, %v787
        %v911 = vpack.c.b16 %v791, %v788
        %v912 = vpack.c.b16 %v792, %v789
        %v913 = vpack.c.b16 %v796, %v793
        %v914 = vpack.c.b16 %v797, %v794
        %v915 = vpack.c.b16 %v798, %v795
        %v916 = vpack.c.b16 %v802, %v799
        %v917 = vpack.c.b16 %v803, %v800
        %v918 = vpack.c.b16 %v804, %v801
        %v919 = vpack.c.b16 %v808, %v805
        %v920 = vpack.c.b16 %v809, %v806
        %v921 = vpack.c.b16 %v810, %v807
        %v922 = vpack.c.b16 %v814, %v811
        %v923 = vpack.c.b16 %v815, %v812
        %v924 = vpack.c.b16 %v816, %v813
        %v925 = vpack.c.b16 %v820, %v817
        %v926 = vpack.c.b16 %v821, %v818
        %v927 = vpack.c.b16 %v822, %v819
        %v928 = vpack.c.b16 %v826, %v823
        %v929 = vpack.c.b16 %v827, %v824
        %v930 = vpack.c.b16 %v828, %v825
        %v931 = vpack.c.b16 %v832, %v829
        %v932 = vpack.c.b16 %v833, %v830
        %v933 = vpack.c.b16 %v834, %v831
        %v934 = vpack.c.b16 %v838, %v835
        %v935 = vpack.c.b16 %v839, %v836
        %v936 = vpack.c.b16 %v840, %v837
        %v937 = vpack.c.b16 %v844, %v841
        %v938 = vpack.c.b16 %v845, %v842
        %v939 = vpack.c.b16 %v846, %v843
        %v940 = vpack.c.b16 %v850, %v847
        %v941 = vpack.c.b16 %v851, %v848
        %v942 = vpack.c.b16 %v852, %v849
        %v943 = vpack.c.b16 %v856, %v853
        %v944 = vpack.c.b16 %v857, %v854
        %v945 = vpack.c.b16 %v858, %v855
        %v946 = vpack.c.b16 %v862, %v859
        %v947 = vpack.c.b16 %v863, %v860
        %v948 = vpack.c.b16 %v864, %v861
        %v949 = vpack.c.b16 %v868, %v865
        %v950 = vpack.c.b16 %v869, %v866
        %v951 = vpack.c.b16 %v870, %v867
        %v952 = vpack.c.b16 %v874, %v871
        %v953 = vpack.c.b16 %v875, %v872
        %v954 = vpack.c.b16 %v876, %v873
        %v955 = vpack.c.b16 %v880, %v877
        %v956 = vpack.c.b16 %v881, %v878
        %v957 = vpack.c.b16 %v882, %v879
        %v958 = vpack.c.b16 %v886, %v883
        %v959 = vpack.c.b16 %v887, %v884
        %v960 = vpack.c.b16 %v888, %v885
        %1033 = vmatpush.bf16.msra.mxu0 %v910
        %1034 = vmatpush.bf16.msra.mxu0 %v907
        %1035 = vmatpush.bf16.msra.mxu0 %v904
        %1036 = vmatpush.bf16.msra.mxu0 %v901
        %1037 = vmatpush.bf16.msra.mxu0 %v898
        %1038 = vmatpush.bf16.msra.mxu0 %v895
        %1039 = vmatpush.bf16.msra.mxu0 %v892
        %1040 = vmatpush.bf16.msra.mxu0 %v889
        %1041 = vmatmul.bf16.gmra.mxu0 %v542
        %v1042 = vpop.f32.mrf.mxu0
        %v1043 = vadd.f32 %v643, %v1042
        %v1044 = vpop.f32.mrf.mxu0
        %1045 = vdwg.mxu0
        %1046 = vmatpush.bf16.msra.mxu0 %v934
        %1047 = vmatpush.bf16.msra.mxu0 %v931
        %1048 = vmatpush.bf16.msra.mxu0 %v928
        %1049 = vmatpush.bf16.msra.mxu0 %v925
        %1050 = vmatpush.bf16.msra.mxu0 %v922
        %1051 = vmatpush.bf16.msra.mxu0 %v919
        %1052 = vmatpush.bf16.msra.mxu0 %v916
        %1053 = vmatpush.bf16.msra.mxu0 %v913
        %1054 = vmatmul.bf16.gmra.mxu0 %v543
        %v1055 = vpop.f32.mrf.mxu0
        %v1056 = vadd.f32 %v1043, %v1055
        %v1057 = vpop.f32.mrf.mxu0
        %1058 = vdwg.mxu0
        %1059 = vmatpush.bf16.msra.mxu0 %v958
        %1060 = vmatpush.bf16.msra.mxu0 %v955
        %1061 = vmatpush.bf16.msra.mxu0 %v952
        %1062 = vmatpush.bf16.msra.mxu0 %v949
        %1063 = vmatpush.bf16.msra.mxu0 %v946
        %1064 = vmatpush.bf16.msra.mxu0 %v943
        %1065 = vmatpush.bf16.msra.mxu0 %v940
        %1066 = vmatpush.bf16.msra.mxu0 %v937
        %1067 = vmatmul.bf16.gmra.mxu0 %v544
        %v1068 = vpop.f32.mrf.mxu0
        %v1069 = vadd.f32 %v1056, %v1068
        %v1070 = vpop.f32.mrf.mxu0
        %1071 = vdwg.mxu0
        %1072 = vmatpush.bf16.msra.mxu0 %v911
        %1073 = vmatpush.bf16.msra.mxu0 %v908
        %1074 = vmatpush.bf16.msra.mxu0 %v905
        %1075 = vmatpush.bf16.msra.mxu0 %v902
        %1076 = vmatpush.bf16.msra.mxu0 %v899
        %1077 = vmatpush.bf16.msra.mxu0 %v896
        %1078 = vmatpush.bf16.msra.mxu0 %v893
        %1079 = vmatpush.bf16.msra.mxu0 %v890
        %1080 = vmatmul.bf16.gmra.mxu0 %v542
        %v1081 = vpop.f32.mrf.mxu0
        %v1082 = vadd.f32 %v644, %v1081
        %v1083 = vpop.f32.mrf.mxu0
        %1084 = vdwg.mxu0
        %1085 = vmatpush.bf16.msra.mxu0 %v935
        %1086 = vmatpush.bf16.msra.mxu0 %v932
        %1087 = vmatpush.bf16.msra.mxu0 %v929
        %1088 = vmatpush.bf16.msra.mxu0 %v926
        %1089 = vmatpush.bf16.msra.mxu0 %v923
        %1090 = vmatpush.bf16.msra.mxu0 %v920
        %1091 = vmatpush.bf16.msra.mxu0 %v917
        %1092 = vmatpush.bf16.msra.mxu0 %v914
        %1093 = vmatmul.bf16.gmra.mxu0 %v543
        %v1094 = vpop.f32.mrf.mxu0
        %v1095 = vadd.f32 %v1082, %v1094
        %v1096 = vpop.f32.mrf.mxu0
        %1097 = vdwg.mxu0
        %1098 = vmatpush.bf16.msra.mxu0 %v959
        %1099 = vmatpush.bf16.msra.mxu0 %v956
        %1100 = vmatpush.bf16.msra.mxu0 %v953
        %1101 = vmatpush.bf16.msra.mxu0 %v950
        %1102 = vmatpush.bf16.msra.mxu0 %v947
        %1103 = vmatpush.bf16.msra.mxu0 %v944
        %1104 = vmatpush.bf16.msra.mxu0 %v941
        %1105 = vmatpush.bf16.msra.mxu0 %v938
        %1106 = vmatmul.bf16.gmra.mxu0 %v544
        %v1107 = vpop.f32.mrf.mxu0
        %v1108 = vadd.f32 %v1095, %v1107
        %v1109 = vpop.f32.mrf.mxu0
        %1110 = vdwg.mxu0
        %1111 = vmatpush.bf16.msra.mxu0 %v912
        %1112 = vmatpush.bf16.msra.mxu0 %v909
        %1113 = vmatpush.bf16.msra.mxu0 %v906
        %1114 = vmatpush.bf16.msra.mxu0 %v903
        %1115 = vmatpush.bf16.msra.mxu0 %v900
        %1116 = vmatpush.bf16.msra.mxu0 %v897
        %1117 = vmatpush.bf16.msra.mxu0 %v894
        %1118 = vmatpush.bf16.msra.mxu0 %v891
        %1119 = vmatmul.bf16.gmra.mxu0 %v542
        %v1120 = vpop.f32.mrf.mxu0
        %v1121 = vadd.f32 %v645, %v1120
        %v1122 = vpop.f32.mrf.mxu0
        %1123 = vdwg.mxu0
        %1124 = vmatpush.bf16.msra.mxu0 %v936
        %1125 = vmatpush.bf16.msra.mxu0 %v933
        %1126 = vmatpush.bf16.msra.mxu0 %v930
        %1127 = vmatpush.bf16.msra.mxu0 %v927
        %1128 = vmatpush.bf16.msra.mxu0 %v924
        %1129 = vmatpush.bf16.msra.mxu0 %v921
        %1130 = vmatpush.bf16.msra.mxu0 %v918
        %1131 = vmatpush.bf16.msra.mxu0 %v915
        %1132 = vmatmul.bf16.gmra.mxu0 %v543
        %v1133 = vpop.f32.mrf.mxu0
        %v1134 = vadd.f32 %v1121, %v1133
        %v1135 = vpop.f32.mrf.mxu0
        %1136 = vdwg.mxu0
        %1137 = vmatpush.bf16.msra.mxu0 %v960
        %1138 = vmatpush.bf16.msra.mxu0 %v957
        %1139 = vmatpush.bf16.msra.mxu0 %v954
        %1140 = vmatpush.bf16.msra.mxu0 %v951
        %1141 = vmatpush.bf16.msra.mxu0 %v948
        %1142 = vmatpush.bf16.msra.mxu0 %v945
        %1143 = vmatpush.bf16.msra.mxu0 %v942
        %1144 = vmatpush.bf16.msra.mxu0 %v939
        %1145 = vmatmul.bf16.gmra.mxu0 %v544
        %v1146 = vpop.f32.mrf.mxu0
        %v1147 = vadd.f32 %v1134, %v1146
        %v1148 = vpop.f32.mrf.mxu0
        %1149 = vdwg.mxu0
        %v1150 = vpack.c.bf16 %v1108, %v1069
        %v1151 = vpack.c.bf16 %v1147, %v1147
        %v1152 = vunpack.c.l.bf16 %v1150
        %v1153 = vunpack.c.h.bf16 %v1150
        %v1154 = vunpack.c.l.bf16 %v1151
        %v1155 = vmax.f32 %v1152, 0.0
        %v1156 = vmax.f32 %v1153, 0.0
        %v1157 = vmax.f32 %v1154, 0.0
        %v1158 = vpack.c.bf16 %v1155, %v1155
        %v1159 = vpack.c.bf16 %v1156, %v1156
        %v1160 = vpack.c.bf16 %v1157, %v1157
        %v1161 = vld [vmem:[#allocation7] sm:$0xf]
        %v1162 = vld [vmem:[#allocation7 + $0x4] sm:$0xf]
        %v1163 = vld [vmem:[#allocation7 + $0x8] sm:$0xf]
        %v1164 = vld [vmem:[#allocation7 + $0xc] sm:$0xf]
        %v1165 = vld [vmem:[#allocation7 + $0x10] sm:$0xf]
        %v1166 = vld [vmem:[#allocation7 + $0x14] sm:$0xf]
        %v1167 = vld [vmem:[#allocation7 + $0x18] sm:$0xf]
        %v1168 = vld [vmem:[#allocation7 + $0x1c] sm:$0xf]
        %v1169 = vld [vmem:[#allocation7 + $0x20] sm:$0xf]
        %v1170 = vld [vmem:[#allocation7 + $0x24] sm:$0xf]
        %v1171 = vld [vmem:[#allocation7 + $0x28] sm:$0xf]
        %v1172 = vld [vmem:[#allocation7 + $0x2c] sm:$0xf]
        %v1173 = vld [vmem:[#allocation7 + $0x30] sm:$0xf]
        %v1174 = vld [vmem:[#allocation7 + $0x34] sm:$0xf]
        %v1175 = vld [vmem:[#allocation7 + $0x38] sm:$0xf]
        %v1176 = vld [vmem:[#allocation7 + $0x3c] sm:$0xf]
        %v1177 = vld [vmem:[#allocation7 + $0x40] sm:$0xf]
        %v1178 = vld [vmem:[#allocation7 + $0x44] sm:$0xf]
        %v1179 = vld [vmem:[#allocation7 + $0x48] sm:$0xf]
        %v1180 = vld [vmem:[#allocation7 + $0x4c] sm:$0xf]
        %v1181 = vld [vmem:[#allocation7 + $0x50] sm:$0xf]
        %v1182 = vld [vmem:[#allocation7 + $0x54] sm:$0xf]
        %v1183 = vld [vmem:[#allocation7 + $0x58] sm:$0xf]
        %v1184 = vld [vmem:[#allocation7 + $0x5c] sm:$0xf]
        %v1185 = vld [vmem:[#allocation7 + $0x60] sm:$0xf]
        %v1186 = vld [vmem:[#allocation7 + $0x64] sm:$0xf]
        %v1187 = vld [vmem:[#allocation7 + $0x68] sm:$0xf]
        %v1188 = vld [vmem:[#allocation7 + $0x6c] sm:$0xf]
        %v1189 = vld [vmem:[#allocation7 + $0x70] sm:$0xf]
        %v1190 = vld [vmem:[#allocation7 + $0x74] sm:$0xf]
        %v1191 = vld [vmem:[#allocation7 + $0x78] sm:$0xf]
        %v1192 = vld [vmem:[#allocation7 + $0x7c] sm:$0xf]
        %v1193 = vld [vmem:[#allocation7 + $0x80] sm:$0xf]
        %v1194 = vld [vmem:[#allocation7 + $0x84] sm:$0xf]
        %v1195 = vld [vmem:[#allocation7 + $0x88] sm:$0xf]
        %v1196 = vld [vmem:[#allocation7 + $0x8c] sm:$0xf]
        %v1197 = vld [vmem:[#allocation7 + $0x90] sm:$0xf]
        %v1198 = vld [vmem:[#allocation7 + $0x94] sm:$0xf]
        %v1199 = vld [vmem:[#allocation7 + $0x98] sm:$0xf]
        %v1200 = vld [vmem:[#allocation7 + $0x9c] sm:$0xf]
        %v1201 = vld [vmem:[#allocation7 + $0xa0] sm:$0xf]
        %v1202 = vld [vmem:[#allocation7 + $0xa4] sm:$0xf]
        %v1203 = vld [vmem:[#allocation7 + $0xa8] sm:$0xf]
        %v1204 = vld [vmem:[#allocation7 + $0xac] sm:$0xf]
        %v1205 = vld [vmem:[#allocation7 + $0xb0] sm:$0xf]
        %v1206 = vld [vmem:[#allocation7 + $0xb4] sm:$0xf]
        %v1207 = vld [vmem:[#allocation7 + $0xb8] sm:$0xf]
        %v1208 = vld [vmem:[#allocation7 + $0xbc] sm:$0xf]
        %v1257 = vunpack.c.l.b16 %v1161
        %v1258 = vunpack.c.l.b16 %v1162
        %v1259 = vunpack.c.l.b16 %v1163
        %v1260 = vunpack.c.l.b16 %v1164
        %v1261 = vunpack.c.l.b16 %v1165
        %v1262 = vunpack.c.l.b16 %v1166
        %v1263 = vunpack.c.l.b16 %v1167
        %v1264 = vunpack.c.l.b16 %v1168
        %v1265 = vunpack.c.l.b16 %v1169
        %v1266 = vunpack.c.l.b16 %v1170
        %v1267 = vunpack.c.l.b16 %v1171
        %v1268 = vunpack.c.l.b16 %v1172
        %v1269 = vunpack.c.l.b16 %v1173
        %v1270 = vunpack.c.l.b16 %v1174
        %v1271 = vunpack.c.l.b16 %v1175
        %v1272 = vunpack.c.l.b16 %v1176
        %v1273 = vunpack.c.l.b16 %v1177
        %v1274 = vunpack.c.l.b16 %v1178
        %v1275 = vunpack.c.l.b16 %v1179
        %v1276 = vunpack.c.l.b16 %v1180
        %v1277 = vunpack.c.l.b16 %v1181
        %v1278 = vunpack.c.l.b16 %v1182
        %v1279 = vunpack.c.l.b16 %v1183
        %v1280 = vunpack.c.l.b16 %v1184
        %v1281 = vunpack.c.l.b16 %v1185
        %v1282 = vunpack.c.l.b16 %v1186
        %v1283 = vunpack.c.l.b16 %v1187
        %v1284 = vunpack.c.l.b16 %v1188
        %v1285 = vunpack.c.l.b16 %v1189
        %v1286 = vunpack.c.l.b16 %v1190
        %v1287 = vunpack.c.l.b16 %v1191
        %v1288 = vunpack.c.l.b16 %v1192
        %v1289 = vunpack.c.l.b16 %v1193
        %v1290 = vunpack.c.l.b16 %v1194
        %v1291 = vunpack.c.l.b16 %v1195
        %v1292 = vunpack.c.l.b16 %v1196
        %v1293 = vunpack.c.l.b16 %v1197
        %v1294 = vunpack.c.l.b16 %v1198
        %v1295 = vunpack.c.l.b16 %v1199
        %v1296 = vunpack.c.l.b16 %v1200
        %v1297 = vunpack.c.l.b16 %v1201
        %v1298 = vunpack.c.l.b16 %v1202
        %v1299 = vunpack.c.l.b16 %v1203
        %v1300 = vunpack.c.l.b16 %v1204
        %v1301 = vunpack.c.l.b16 %v1205
        %v1302 = vunpack.c.l.b16 %v1206
        %v1303 = vunpack.c.l.b16 %v1207
        %v1304 = vunpack.c.l.b16 %v1208
        %v1305 = vpack.c.b16 %v1258, %v1257
        %v1306 = vpack.c.b16 %v1260, %v1259
        %v1307 = vpack.c.b16 %v1262, %v1261
        %v1308 = vpack.c.b16 %v1264, %v1263
        %v1309 = vpack.c.b16 %v1266, %v1265
        %v1310 = vpack.c.b16 %v1268, %v1267
        %v1311 = vpack.c.b16 %v1270, %v1269
        %v1312 = vpack.c.b16 %v1272, %v1271
        %v1313 = vpack.c.b16 %v1274, %v1273
        %v1314 = vpack.c.b16 %v1276, %v1275
        %v1315 = vpack.c.b16 %v1278, %v1277
        %v1316 = vpack.c.b16 %v1280, %v1279
        %v1317 = vpack.c.b16 %v1282, %v1281
        %v1318 = vpack.c.b16 %v1284, %v1283
        %v1319 = vpack.c.b16 %v1286, %v1285
        %v1320 = vpack.c.b16 %v1288, %v1287
        %v1321 = vpack.c.b16 %v1290, %v1289
        %v1322 = vpack.c.b16 %v1292, %v1291
        %v1323 = vpack.c.b16 %v1294, %v1293
        %v1324 = vpack.c.b16 %v1296, %v1295
        %v1325 = vpack.c.b16 %v1298, %v1297
        %v1326 = vpack.c.b16 %v1300, %v1299
        %v1327 = vpack.c.b16 %v1302, %v1301
        %v1328 = vpack.c.b16 %v1304, %v1303
        %1353 = vmatpush.bf16.msra.mxu0 %v1312
        %1354 = vmatpush.bf16.msra.mxu0 %v1311
        %1355 = vmatpush.bf16.msra.mxu0 %v1310
        %1356 = vmatpush.bf16.msra.mxu0 %v1309
        %1357 = vmatpush.bf16.msra.mxu0 %v1308
        %1358 = vmatpush.bf16.msra.mxu0 %v1307
        %1359 = vmatpush.bf16.msra.mxu0 %v1306
        %1360 = vmatpush.bf16.msra.mxu0 %v1305
        %1361 = vmatmul.bf16.gmra.mxu0 %v1158
        %v1362 = vpop.f32.mrf.mxu0
        %v1363 = vadd.f32 0.0, %v1362
        %v1364 = vpop.f32.mrf.mxu0
        %1365 = vdwg.mxu0
        %1366 = vmatpush.bf16.msra.mxu0 %v1320
        %1367 = vmatpush.bf16.msra.mxu0 %v1319
        %1368 = vmatpush.bf16.msra.mxu0 %v1318
        %1369 = vmatpush.bf16.msra.mxu0 %v1317
        %1370 = vmatpush.bf16.msra.mxu0 %v1316
        %1371 = vmatpush.bf16.msra.mxu0 %v1315
        %1372 = vmatpush.bf16.msra.mxu0 %v1314
        %1373 = vmatpush.bf16.msra.mxu0 %v1313
        %1374 = vmatmul.bf16.gmra.mxu0 %v1159
        %v1375 = vpop.f32.mrf.mxu0
        %v1376 = vadd.f32 %v1363, %v1375
        %v1377 = vpop.f32.mrf.mxu0
        %1378 = vdwg.mxu0
        %1379 = vmatpush.bf16.msra.mxu0 %v1328
        %1380 = vmatpush.bf16.msra.mxu0 %v1327
        %1381 = vmatpush.bf16.msra.mxu0 %v1326
        %1382 = vmatpush.bf16.msra.mxu0 %v1325
        %1383 = vmatpush.bf16.msra.mxu0 %v1324
        %1384 = vmatpush.bf16.msra.mxu0 %v1323
        %1385 = vmatpush.bf16.msra.mxu0 %v1322
        %1386 = vmatpush.bf16.msra.mxu0 %v1321
        %1387 = vmatmul.bf16.gmra.mxu0 %v1160
        %v1388 = vpop.f32.mrf.mxu0
        %v1389 = vadd.f32 %v1376, %v1388
        %v1390 = vpop.f32.mrf.mxu0
        %1391 = vdwg.mxu0
        %v1392 = vld [vmem:[#allocation2] sm:$0x1]
        %v1394 = vperm.slane %v1392, 0
        %v1396 = vadd.f32 %v1389, %v1394
        %v1397 = vxor.u32 %v1396, 2147483648
        %v1398 = vmul.f32 %v1397, 1.442695
        %v1399 = vpow.pop %v1398
        %v1400 = vadd.f32 %v1399, 1.0
        %v1401 = vrcp.pop %v1400
        %v1402 = vmul.f32 %v1400, %v1401
        %v1403 = vsub.f32 1.0, %v1402
        %v1404 = vmul.f32 %v1401, %v1403
        %v1405 = vadd.f32 %v1401, %v1404
        %vm1406 = vweird.f32 %v1400
        %vm1407 = vweird.f32 %v1401
        %vm1408 = vmor %vm1406, %vm1407
        %v1409 = vsel %vm1408, %v1401, %v1405
        %v1410 = vand.u32 2147483647, %v1400
        %vm1411 = vcmp.eq.f32.partialorder %v1410, 8.507059e+37
        %v1412 = vand.u32 %v1400, 2147483648
        %v1413 = vor.u32 1.1754944e-38, %v1412
        %v1414 = vsel %vm1411, %v1413, %v1409
        %v1415 = vmul.f32 1.0, %v1414
        %vm1416 = vcmask 7168
        %1417 = vst.msk [vmem:[%s325] sm:$0xff] %vm1416, %v1415
        %p1418 = scmp.lt.s32.totalorder %s22, 1
        %s1419 = scalar_select %p1418, %s22, 1
        %s1420 = smul.addr %s1419, 8
        %s1421 = scalar_lea.vmem %s7, %s1420
        // Predicated region
        $region61: #{safe_critic_forward.1} parent=47 // pred_check
          %p1422 = pneg %p192
        $region62: #{safe_critic_forward.1} parent=47 // pred_check_branch
          %1424 = sbr.rel (%p1422) target = $region64
        $region63: #{safe_critic_forward.1} parent=47 // pred_region
          _
        $region64: #{safe_critic_forward.1} parent=47 // pred_fallthru
          _
      $region48: #{safe_critic_forward.1} parent=5 // pred_fallthru
        _
      %p1425 = scmp.le.s32.totalorder 2, %s17
      // Predicated region
      $region65: #{safe_critic_forward.1} parent=5 // pred_check
        %p1426 = pneg %p1425
      $region66: #{safe_critic_forward.1} parent=5 // pred_check_branch
        %1428 = sbr.rel (%p1426) target = $region68
      $region67: #{safe_critic_forward.1} parent=5 // pred_region
        %s1429 = ssub.s32 %s17, 2
        // Predicated region
        $region69: #{safe_critic_forward.1} parent=67 // pred_check
          %p1430 = pneg %p198
        $region70: #{safe_critic_forward.1} parent=67 // pred_check_branch
          %1432 = sbr.rel (%p1430) target = $region72
        $region71: #{safe_critic_forward.1} parent=67 // pred_region
          %p1433 = scmp.lt.s32.totalorder %s23, 1
          %s1434 = scalar_select %p1433, %s23, 1
          %s1435 = smul.addr %s1434, 8
          %s1436 = scalar_lea.vmem %s7, %s1435
        $region72: #{safe_critic_forward.1} parent=67 // pred_fallthru
          _
      $region68: #{safe_critic_forward.1} parent=5 // pred_fallthru
        _
    $region6: #{safe_critic_forward.1} parent=1 // loop_footer
      %s21 = sadd.s32 1, %s17
    $region7: #{safe_critic_forward.1} parent=1 // loop_footer_branch
      %16 = sbr.rel target = $region3
    $region8: #{safe_critic_forward.1} parent=1 // loop_exit
      _
    %1437 = vsyncpa [#allocation4], 1
    %s1438 = scalar_lea.sflag [#allocation4], 1
    %1439 = vsyncpa %s1438, 1
    %1440 = vsyncpa [#allocation6], 1

</llo_original>
